<compile_context>
chip_gen: v7x
topology: tpu7x:2x2x1
jax: 0.10.0
libtpu: 0.0.40
codegen_flags: <defaults>
</compile_context>

<pallas_src>
import functools

import jax
import jax.numpy as jnp
from jax.experimental import pallas as pl
from jax.experimental.pallas import tpu as pltpu

LANE = 128          # lane-dense width for hidden / output feature dims
MAX_TB = 2048       # batch-tile cap; ~7.5 MiB resident set at f32


def _sigmoid(s):
    # 1/(1+exp(-s)) == 0.5*(tanh(s/2)+1); tanh runs on the EUP slot.
    return 0.5 * (jnp.tanh(0.5 * s) + 1.0)


def mlp_kernel(x_ref, w1_ref, w2_ref, w3_ref, w4_ref, o_ref):
    x = x_ref[...]                                                       # (TB, 6)
    h = _sigmoid(jnp.dot(x, w1_ref[...], preferred_element_type=jnp.float32))
    h = _sigmoid(jnp.dot(h, w2_ref[...], preferred_element_type=jnp.float32))
    h = _sigmoid(jnp.dot(h, w3_ref[...], preferred_element_type=jnp.float32))
    h = _sigmoid(jnp.dot(h, w4_ref[...], preferred_element_type=jnp.float32))
    o_ref[...] = h.astype(o_ref.dtype)                                   # (TB, 128)


def _cdiv(a, b):
    return (a + b - 1) // b


def _round_up(n, m):
    return ((n + m - 1) // m) * m


def _pad2d(a, rows, cols):
    r, c = a.shape
    return jnp.pad(a, ((0, rows - r), (0, cols - c)))


def prepare_weights(w1, w2, w3, w4):
    """Pad weights once at model init (hoisted out of the per-call hot path).

    W1 keeps its real contraction dim (6) and is padded only on the output dim;
    W2..W4 are padded to (128, 128) with zero rows/cols so dead lanes never
    leak into real lanes.
    """
    w1_p = jnp.pad(w1, ((0, 0), (0, LANE - w1.shape[1])))
    w2_p = _pad2d(w2, LANE, LANE)
    w3_p = _pad2d(w3, LANE, LANE)
    w4_p = _pad2d(w4, LANE, LANE)
    return w1_p, w2_p, w3_p, w4_p


@functools.partial(jax.jit, static_argnames=("out_dim",))
def neural_network_forward(x, w1_p, w2_p, w3_p, w4_p, *, out_dim=6):
    B, in_dim = x.shape

    # Balanced batch tiling: avoid ~2x padding, keep >= 2 (even) tiles for
    # v7x megacore once there is enough work, tiles a multiple of 8 rows.
    n_tiles = _cdiv(B, MAX_TB)
    if B >= 16:
        n_tiles = max(n_tiles, 2)
        if n_tiles % 2:
            n_tiles += 1
    tb = _round_up(_cdiv(B, n_tiles), 8)
    b_pad = n_tiles * tb

    # Pad only the batch dim of X; its 6 real lanes stream at real width.
    x_p = jnp.pad(x, ((0, b_pad - B), (0, 0)))

    # Cost estimate from the padded shapes the kernel actually touches.
    cost = pl.CostEstimate(
        flops=2 * b_pad * (in_dim * LANE + 3 * LANE * LANE),
        transcendentals=4 * b_pad * LANE,
        bytes_accessed=4 * (b_pad * in_dim + b_pad * LANE
                            + in_dim * LANE + 3 * LANE * LANE),
    )

    w1_spec = pl.BlockSpec((in_dim, LANE), lambda i: (0, 0))   # VMEM-resident
    w_spec = pl.BlockSpec((LANE, LANE), lambda i: (0, 0))      # VMEM-resident

    out_p = pl.pallas_call(
        mlp_kernel,
        out_shape=jax.ShapeDtypeStruct((b_pad, LANE), jnp.float32),
        grid=(n_tiles,),
        in_specs=[
            pl.BlockSpec((tb, in_dim), lambda i: (i, 0)),      # X streams at real width
            w1_spec, w_spec, w_spec, w_spec,
        ],
        out_specs=pl.BlockSpec((tb, LANE), lambda i: (i, 0)),  # lane-dense output tile
        compiler_params=pltpu.CompilerParams(
            dimension_semantics=("parallel",),
            vmem_limit_bytes=32 * 1024 * 1024,
        ),
        cost_estimate=cost,
    )(x_p, w1_p, w2_p, w3_p, w4_p)

    # Drop padded batch rows and padded output lanes.
    return out_p[:B, :out_dim]


if __name__ == "__main__":
    input_size, hidden1, hidden2, hidden3, output_size = 6, 50, 50, 50, 6
    batch = 8

    key = jax.random.PRNGKey(0)
    kx, k1, k2, k3, k4 = jax.random.split(key, 5)

    # Deterministic stand-ins for torch.randn(...) weights.
    X = jax.random.normal(kx, (batch, input_size), dtype=jnp.float32)
    W1 = jax.random.normal(k1, (input_size, hidden1), dtype=jnp.float32)
    W2 = jax.random.normal(k2, (hidden1, hidden2), dtype=jnp.float32)
    W3 = jax.random.normal(k3, (hidden2, hidden3), dtype=jnp.float32)
    W4 = jax.random.normal(k4, (hidden3, output_size), dtype=jnp.float32)

    # Pad weights once ("model init"), then run the fused forward kernel.
    W1p, W2p, W3p, W4p = prepare_weights(W1, W2, W3, W4)
    out = neural_network_forward(X, W1p, W2p, W3p, W4p, out_dim=output_size)
    out = jax.block_until_ready(out)

    # Pure-JAX reference of the same forward pass (matches the torch module).
    def ref(x):
        s = lambda v: 1.0 / (1.0 + jnp.exp(-v))
        return s(s(s(s(x @ W1) @ W2) @ W3) @ W4)

    ref_out = jax.block_until_ready(ref(X))
    assert out.shape == (batch, output_size)
    assert jnp.allclose(out, ref_out, atol=1e-5, rtol=1e-5)

    print("KERNEL_OK")
</pallas_src>

<mosaic_0001>
module attributes {stable_mosaic.version = 11 : i64} {
  func.func @mlp_kernel(%arg0: i32, %arg1: memref<8x6xf32, #tpu.memory_space<vmem>>, %arg2: memref<6x128xf32, #tpu.memory_space<vmem>>, %arg3: memref<128x128xf32, #tpu.memory_space<vmem>>, %arg4: memref<128x128xf32, #tpu.memory_space<vmem>>, %arg5: memref<128x128xf32, #tpu.memory_space<vmem>>, %arg6: memref<8x128xf32, #tpu.memory_space<vmem>>) attributes {dimension_semantics = [#tpu.dimension_semantics<parallel>], iteration_bounds = array<i64: 1>, scalar_prefetch = 0 : i64, scratch_operands = 0 : i64, tpu.core_type = #tpu.core_type<tc>, window_params = [{transform_indices = @transform_0, window_bounds = array<i64: 8, 6>}, {pipeline_mode = #tpu.pipeline_mode<synchronous>, transform_indices = @transform_1, window_bounds = array<i64: 6, 128>}, {pipeline_mode = #tpu.pipeline_mode<synchronous>, transform_indices = @transform_2, window_bounds = array<i64: 128, 128>}, {pipeline_mode = #tpu.pipeline_mode<synchronous>, transform_indices = @transform_3, window_bounds = array<i64: 128, 128>}, {pipeline_mode = #tpu.pipeline_mode<synchronous>, transform_indices = @transform_4, window_bounds = array<i64: 128, 128>}, {transform_indices = @transform_5, window_bounds = array<i64: 8, 128>}]} {
    %c0 = arith.constant 0 : index
    %c0_0 = arith.constant 0 : index
    %0 = vector.load %arg1[%c0, %c0_0] : memref<8x6xf32, #tpu.memory_space<vmem>>, vector<8x6xf32>
    %c0_1 = arith.constant 0 : index
    %c0_2 = arith.constant 0 : index
    %1 = vector.load %arg2[%c0_1, %c0_2] : memref<6x128xf32, #tpu.memory_space<vmem>>, vector<6x128xf32>
    %cst = arith.constant dense<0.000000e+00> : vector<8x128xf32>
    %2 = tpu.matmul %0, %1, %cst {dimension_numbers = #tpu.dot_dimension_numbers<[1], [0], [0], [1], [0, 0, 1, 1], [], []>} : vector<8x6xf32>, vector<6x128xf32>, vector<8x128xf32> -> vector<8x128xf32>
    %cst_3 = arith.constant 5.000000e-01 : f32
    %3 = vector.broadcast %cst_3 : f32 to vector<8x128xf32>
    %4 = arith.mulf %3, %2 : vector<8x128xf32>
    %5 = math.tanh %4 : vector<8x128xf32>
    %cst_4 = arith.constant 1.000000e+00 : f32
    %6 = vector.broadcast %cst_4 : f32 to vector<8x128xf32>
    %7 = arith.addf %5, %6 : vector<8x128xf32>
    %cst_5 = arith.constant 5.000000e-01 : f32
    %8 = vector.broadcast %cst_5 : f32 to vector<8x128xf32>
    %9 = arith.mulf %8, %7 : vector<8x128xf32>
    %c0_6 = arith.constant 0 : index
    %c0_7 = arith.constant 0 : index
    %10 = vector.load %arg3[%c0_6, %c0_7] : memref<128x128xf32, #tpu.memory_space<vmem>>, vector<128x128xf32>
    %cst_8 = arith.constant dense<0.000000e+00> : vector<8x128xf32>
    %11 = tpu.matmul %9, %10, %cst_8 {dimension_numbers = #tpu.dot_dimension_numbers<[1], [0], [0], [1], [0, 0, 1, 1], [], []>} : vector<8x128xf32>, vector<128x128xf32>, vector<8x128xf32> -> vector<8x128xf32>
    %cst_9 = arith.constant 5.000000e-01 : f32
    %12 = vector.broadcast %cst_9 : f32 to vector<8x128xf32>
    %13 = arith.mulf %12, %11 : vector<8x128xf32>
    %14 = math.tanh %13 : vector<8x128xf32>
    %cst_10 = arith.constant 1.000000e+00 : f32
    %15 = vector.broadcast %cst_10 : f32 to vector<8x128xf32>
    %16 = arith.addf %14, %15 : vector<8x128xf32>
    %cst_11 = arith.constant 5.000000e-01 : f32
    %17 = vector.broadcast %cst_11 : f32 to vector<8x128xf32>
    %18 = arith.mulf %17, %16 : vector<8x128xf32>
    %c0_12 = arith.constant 0 : index
    %c0_13 = arith.constant 0 : index
    %19 = vector.load %arg4[%c0_12, %c0_13] : memref<128x128xf32, #tpu.memory_space<vmem>>, vector<128x128xf32>
    %cst_14 = arith.constant dense<0.000000e+00> : vector<8x128xf32>
    %20 = tpu.matmul %18, %19, %cst_14 {dimension_numbers = #tpu.dot_dimension_numbers<[1], [0], [0], [1], [0, 0, 1, 1], [], []>} : vector<8x128xf32>, vector<128x128xf32>, vector<8x128xf32> -> vector<8x128xf32>
    %cst_15 = arith.constant 5.000000e-01 : f32
    %21 = vector.broadcast %cst_15 : f32 to vector<8x128xf32>
    %22 = arith.mulf %21, %20 : vector<8x128xf32>
    %23 = math.tanh %22 : vector<8x128xf32>
    %cst_16 = arith.constant 1.000000e+00 : f32
    %24 = vector.broadcast %cst_16 : f32 to vector<8x128xf32>
    %25 = arith.addf %23, %24 : vector<8x128xf32>
    %cst_17 = arith.constant 5.000000e-01 : f32
    %26 = vector.broadcast %cst_17 : f32 to vector<8x128xf32>
    %27 = arith.mulf %26, %25 : vector<8x128xf32>
    %c0_18 = arith.constant 0 : index
    %c0_19 = arith.constant 0 : index
    %28 = vector.load %arg5[%c0_18, %c0_19] : memref<128x128xf32, #tpu.memory_space<vmem>>, vector<128x128xf32>
    %cst_20 = arith.constant dense<0.000000e+00> : vector<8x128xf32>
    %29 = tpu.matmul %27, %28, %cst_20 {dimension_numbers = #tpu.dot_dimension_numbers<[1], [0], [0], [1], [0, 0, 1, 1], [], []>} : vector<8x128xf32>, vector<128x128xf32>, vector<8x128xf32> -> vector<8x128xf32>
    %cst_21 = arith.constant 5.000000e-01 : f32
    %30 = vector.broadcast %cst_21 : f32 to vector<8x128xf32>
    %31 = arith.mulf %30, %29 : vector<8x128xf32>
    %32 = math.tanh %31 : vector<8x128xf32>
    %cst_22 = arith.constant 1.000000e+00 : f32
    %33 = vector.broadcast %cst_22 : f32 to vector<8x128xf32>
    %34 = arith.addf %32, %33 : vector<8x128xf32>
    %cst_23 = arith.constant 5.000000e-01 : f32
    %35 = vector.broadcast %cst_23 : f32 to vector<8x128xf32>
    %36 = arith.mulf %35, %34 : vector<8x128xf32>
    %c0_24 = arith.constant 0 : index
    %c0_25 = arith.constant 0 : index
    %37 = vector.load %arg6[%c0_24, %c0_25] : memref<8x128xf32, #tpu.memory_space<vmem>>, vector<8x128xf32>
    tpu.vector_store %arg6[%c0_24, %c0_25], %36 {strides = array<i32>} : memref<8x128xf32, #tpu.memory_space<vmem>>, vector<8x128xf32>,
    return
  }
  func.func @transform_0(%arg0: i32) -> (i32, i32) {
    %c0_i32 = arith.constant 0 : i32
    %c0_i32_0 = arith.constant 0 : i32
    return %arg0, %c0_i32 : i32, i32
  }
  func.func @transform_1(%arg0: i32) -> (i32, i32) {
    %c0_i32 = arith.constant 0 : i32
    %c0_i32_0 = arith.constant 0 : i32
    %c0_i32_1 = arith.constant 0 : i32
    return %c0_i32, %c0_i32_0 : i32, i32
  }
  func.func @transform_2(%arg0: i32) -> (i32, i32) {
    %c0_i32 = arith.constant 0 : i32
    %c0_i32_0 = arith.constant 0 : i32
    %c0_i32_1 = arith.constant 0 : i32
    return %c0_i32, %c0_i32_0 : i32, i32
  }
  func.func @transform_3(%arg0: i32) -> (i32, i32) {
    %c0_i32 = arith.constant 0 : i32
    %c0_i32_0 = arith.constant 0 : i32
    %c0_i32_1 = arith.constant 0 : i32
    return %c0_i32, %c0_i32_0 : i32, i32
  }
  func.func @transform_4(%arg0: i32) -> (i32, i32) {
    %c0_i32 = arith.constant 0 : i32
    %c0_i32_0 = arith.constant 0 : i32
    %c0_i32_1 = arith.constant 0 : i32
    return %c0_i32, %c0_i32_0 : i32, i32
  }
  func.func @transform_5(%arg0: i32) -> (i32, i32) {
    %c0_i32 = arith.constant 0 : i32
    %c0_i32_0 = arith.constant 0 : i32
    return %arg0, %c0_i32 : i32, i32
  }
}

</mosaic_0001>

<llo_original>
// kernel: neural_network_forward.1
$region0: #{neural_network_forward.1}
  #allocation0 [shape = 'u32[]', space=smem, size = 0x4, offset = 0x4, fixed_abs, tag = 'smem constant byte address 0x4 - core index']
  #allocation1 [shape = 'u32[144,128]{1,0:T(1,128)}', space=vmem, size = 0x12000, scoped, tag = 'internal scratch']
  %s0 = inlined_call_operand.hbm [shape: f32[8,6], index: 0, kind: input, shape index: {}]
  %s1 = inlined_call_operand.hbm [shape: f32[6,128], index: 1, kind: input, shape index: {}]
  %s2 = inlined_call_operand.hbm [shape: f32[128,128], index: 2, kind: input, shape index: {}]
  %s3 = inlined_call_operand.hbm [shape: f32[128,128], index: 3, kind: input, shape index: {}]
  %s4 = inlined_call_operand.hbm [shape: f32[128,128], index: 4, kind: input, shape index: {}]
  %s5 = inlined_call_operand.hbm [shape: f32[8,128], index: 5, kind: output, shape index: {}]
  %s6 = sld [smem:[#allocation0]]
  $region50: #{neural_network_forward.1} parent=0
    _
  %s8 = ssub.s32 1, %s6
  %s9 = scalar_select 0, %s8, %s6
  $region1: #{neural_network_forward.1} parent=0
    #allocation2 [shape = 'u8[4096]{0}', space=vmem, size = 0x1000, scoped, tag = 'input window, operand 0, single buffered']
    #allocation3 [shape = 's32[1]{0}', space=sflag, size = 0x4, scoped, tag = 'scoped memory for neural_network_forward.1']
    #allocation4 [shape = 's32[1]{0}', space=sflag, size = 0x4, scoped, tag = 'scoped memory for neural_network_forward.1']
    #allocation5 [shape = 'u8[4096]{0}', space=vmem, size = 0x1000, scoped, tag = 'input window, operand 1, single buffered']
    #allocation6 [shape = 's32[1]{0}', space=sflag, size = 0x4, scoped, tag = 'scoped memory for neural_network_forward.1']
    #allocation7 [shape = 'u8[65536]{0}', space=vmem, size = 0x10000, scoped, tag = 'input window, operand 2, single buffered']
    #allocation8 [shape = 'u8[65536]{0}', space=vmem, size = 0x10000, scoped, tag = 'input window, operand 3, single buffered']
    #allocation9 [shape = 's32[1]{0}', space=sflag, size = 0x4, scoped, tag = 'scoped memory for neural_network_forward.1']
    #allocation10 [shape = 'u8[65536]{0}', space=vmem, size = 0x10000, scoped, tag = 'input window, operand 4, single buffered']
    #allocation11 [shape = 'u8[4096]{0}', space=vmem, size = 0x1000, scoped, tag = 'output window, operand 0, single buffered']
    %10 = vsyncpa [#allocation3], 0
    %11 = vsyncpa [#allocation6], 0
    %12 = vsyncpa [#allocation9], 0
    %13 = vsyncpa [#allocation4], 0
    // Predicated region
    $region2: #{neural_network_forward.1} parent=1 // pred_check
      _
    $region3: #{neural_network_forward.1} parent=1 // pred_check_branch
      %15 = sbr.rel (0) target = $region5
    $region4: #{neural_network_forward.1} parent=1 // pred_region
      %s17 = ssub.s32 128, 128
      %18 = vsyncadd [#allocation3], %s17
      %s20 = sshll.u32 [#allocation2], 4
      %s21 = int_to_ptr.vmem [resolvable:$true] %s20
      %23 = dma.hbm_to_vmem [thread:$0]  %s0, 128, %s21, [#allocation3]
    $region5: #{neural_network_forward.1} parent=1 // pred_fallthru
      _
    // Predicated region
    $region6: #{neural_network_forward.1} parent=1 // pred_check
      _
    $region7: #{neural_network_forward.1} parent=1 // pred_check_branch
      %25 = sbr.rel (0) target = $region9
    $region8: #{neural_network_forward.1} parent=1 // pred_region
      %s27 = ssub.s32 128, 128
      %28 = vsyncadd [#allocation6], %s27
      %s30 = sshll.u32 [#allocation5], 4
      %s31 = int_to_ptr.vmem [resolvable:$true] %s30
      %33 = dma.hbm_to_vmem [thread:$0]  %s1, 128, %s31, [#allocation6]
    $region9: #{neural_network_forward.1} parent=1 // pred_fallthru
      _
    // Predicated region
    $region10: #{neural_network_forward.1} parent=1 // pred_check
      _
    $region11: #{neural_network_forward.1} parent=1 // pred_check_branch
      %35 = sbr.rel (0) target = $region13
    $region12: #{neural_network_forward.1} parent=1 // pred_region
      %s37 = ssub.s32 2048, 2048
      %38 = vsyncadd [#allocation6], %s37
      %s39 = sshll.u32 [#allocation7], 4
      %s40 = int_to_ptr.vmem [resolvable:$true] %s39
      %45 = dma.hbm_to_vmem [thread:$0]  %s2, 2048, %s40, [#allocation6], 128, 128, 8
    $region13: #{neural_network_forward.1} parent=1 // pred_fallthru
      _
    // Predicated region
    $region14: #{neural_network_forward.1} parent=1 // pred_check
      _
    $region15: #{neural_network_forward.1} parent=1 // pred_check_branch
      %47 = sbr.rel (0) target = $region17
    $region16: #{neural_network_forward.1} parent=1 // pred_region
      %s49 = ssub.s32 2048, 2048
      %50 = vsyncadd [#allocation9], %s49
      %s51 = sshll.u32 [#allocation8], 4
      %s52 = int_to_ptr.vmem [resolvable:$true] %s51
      %57 = dma.hbm_to_vmem [thread:$0]  %s3, 2048, %s52, [#allocation9], 128, 128, 8
    $region17: #{neural_network_forward.1} parent=1 // pred_fallthru
      _
    // Predicated region
    $region18: #{neural_network_forward.1} parent=1 // pred_check
      _
    $region19: #{neural_network_forward.1} parent=1 // pred_check_branch
      %59 = sbr.rel (0) target = $region21
    $region20: #{neural_network_forward.1} parent=1 // pred_region
      %s61 = ssub.s32 2048, 2048
      %62 = vsyncadd [#allocation9], %s61
      %s63 = sshll.u32 [#allocation10], 4
      %s64 = int_to_ptr.vmem [resolvable:$true] %s63
      %69 = dma.hbm_to_vmem [thread:$0]  %s4, 2048, %s64, [#allocation9], 128, 128, 8
    $region21: #{neural_network_forward.1} parent=1 // pred_fallthru
      _
    // Predicated region
    $region22: #{neural_network_forward.1} parent=1 // pred_check
      _
    $region23: #{neural_network_forward.1} parent=1 // pred_check_branch
      %71 = sbr.rel (0) target = $region25
    $region24: #{neural_network_forward.1} parent=1 // pred_region
      %72 = dma.done [#allocation3], 128
    $region25: #{neural_network_forward.1} parent=1 // pred_fallthru
      _
    // Predicated region
    $region26: #{neural_network_forward.1} parent=1 // pred_check
      _
    $region27: #{neural_network_forward.1} parent=1 // pred_check_branch
      %74 = sbr.rel (0) target = $region29
    $region28: #{neural_network_forward.1} parent=1 // pred_region
      %75 = dma.done [#allocation6], 128
    $region29: #{neural_network_forward.1} parent=1 // pred_fallthru
      _
    // Predicated region
    $region30: #{neural_network_forward.1} parent=1 // pred_check
      _
    $region31: #{neural_network_forward.1} parent=1 // pred_check_branch
      %77 = sbr.rel (0) target = $region33
    $region32: #{neural_network_forward.1} parent=1 // pred_region
      %78 = dma.done [#allocation6], 2048
    $region33: #{neural_network_forward.1} parent=1 // pred_fallthru
      _
    // Predicated region
    $region34: #{neural_network_forward.1} parent=1 // pred_check
      _
    $region35: #{neural_network_forward.1} parent=1 // pred_check_branch
      %80 = sbr.rel (0) target = $region37
    $region36: #{neural_network_forward.1} parent=1 // pred_region
      %81 = dma.done [#allocation9], 2048
    $region37: #{neural_network_forward.1} parent=1 // pred_fallthru
      _
    // Predicated region
    $region38: #{neural_network_forward.1} parent=1 // pred_check
      _
    $region39: #{neural_network_forward.1} parent=1 // pred_check_branch
      %83 = sbr.rel (0) target = $region41
    $region40: #{neural_network_forward.1} parent=1 // pred_region
      %84 = dma.done [#allocation9], 2048
    $region41: #{neural_network_forward.1} parent=1 // pred_fallthru
      _
    %v85 = vld [vmem:[#allocation2] sm:$0xff]
    %v86 = vld [vmem:[#allocation5] sm:$0x3f]
    %vm87 = vcmask 48128
    %v89 = vsel %vm87, %v85, 0
    %vm91 = vcmask 1045504
    %v93 = vsel %vm91, %v86, 0
    %95 = vmatprep.subr.mxu0 0.0
    %96 = vmatpush1.msra.mxu0 %v93
    %97 = vmatprep.subr.mxu0 0.0
    %98 = vmatpush1.msra.mxu0 0.0
    %99 = vmatprep.subr.mxu0 0.0
    %100 = vmatpush1.msra.mxu0 0.0
    %101 = vmatprep.subr.mxu0 0.0
    %102 = vmatpush1.msra.mxu0 0.0
    %103 = vmatprep.subr.mxu0 0.0
    %104 = vmatpush1.msra.mxu0 0.0
    %105 = vmatprep.subr.mxu0 0.0
    %106 = vmatpush1.msra.mxu0 0.0
    %107 = vmatprep.subr.mxu0 0.0
    %108 = vmatpush1.msra.mxu0 0.0
    %109 = vmatprep.subr.mxu0 0.0
    %110 = vmatpush1.msra.mxu0 0.0
    %111 = vmatprep.subr.mxu0 0.0
    %112 = vmatpush1.msra.mxu0 0.0
    %113 = vmatprep.subr.mxu0 0.0
    %114 = vmatpush1.msra.mxu0 0.0
    %115 = vmatprep.subr.mxu0 0.0
    %116 = vmatpush1.msra.mxu0 0.0
    %117 = vmatprep.subr.mxu0 0.0
    %118 = vmatpush1.msra.mxu0 0.0
    %119 = vmatprep.subr.mxu0 0.0
    %120 = vmatpush1.msra.mxu0 0.0
    %121 = vmatprep.subr.mxu0 0.0
    %122 = vmatpush1.msra.mxu0 0.0
    %123 = vmatprep.subr.mxu0 0.0
    %124 = vmatpush1.msra.mxu0 0.0
    %125 = vmatprep.subr.mxu0 0.0
    %126 = vmatpush1.msra.mxu0 0.0
    %127 = vmatprep.subr.mxu0 0.0
    %128 = vmatpush1.msra.mxu0 0.0
    %129 = vmatprep.subr.mxu0 0.0
    %130 = vmatpush1.msra.mxu0 0.0
    %131 = vmatprep.subr.mxu0 0.0
    %132 = vmatpush1.msra.mxu0 0.0
    %133 = vmatprep.subr.mxu0 0.0
    %134 = vmatpush1.msra.mxu0 0.0
    %135 = vmatprep.subr.mxu0 0.0
    %136 = vmatpush1.msra.mxu0 0.0
    %137 = vmatprep.subr.mxu0 0.0
    %138 = vmatpush1.msra.mxu0 0.0
    %139 = vmatprep.subr.mxu0 0.0
    %140 = vmatpush1.msra.mxu0 0.0
    %141 = vmatprep.subr.mxu0 0.0
    %142 = vmatpush1.msra.mxu0 0.0
    %143 = vmatprep.subr.mxu0 0.0
    %144 = vmatpush1.msra.mxu0 0.0
    %145 = vmatprep.subr.mxu0 0.0
    %146 = vmatpush1.msra.mxu0 0.0
    %147 = vmatprep.subr.mxu0 0.0
    %148 = vmatpush1.msra.mxu0 0.0
    %149 = vmatprep.subr.mxu0 0.0
    %150 = vmatpush1.msra.mxu0 0.0
    %151 = vmatprep.subr.mxu0 0.0
    %152 = vmatpush1.msra.mxu0 0.0
    %153 = vmatprep.subr.mxu0 0.0
    %154 = vmatpush1.msra.mxu0 0.0
    %155 = vmatprep.subr.mxu0 0.0
    %156 = vmatpush1.msra.mxu0 0.0
    %157 = vmatprep.subr.mxu0 0.0
    %158 = vmatpush1.msra.mxu0 0.0
    %159 = vmatprep.mubr.f32.mxu0 0.0
    %160 = vmatmul.mubr.f32.gmra.mrb[0].mxu0 %v89
    %v161 = vpop.f32.mrb[0].mxu0
    %v162 = vadd.f32 0.0, %v161
    %v163 = vpop.f32.mrb[0].mxu0
    %164 = vdwg.mxu0
    %v165 = vmul.f32 %v162, 0.5
    %v166 = vtanh.pop %v165
    %v167 = vadd.f32 %v166, 1.0
    %v168 = vmul.f32 %v167, 0.5
    %v169 = vld [vmem:[#allocation7] sm:$0xff]
    %v170 = vld [vmem:[#allocation7 + $0x8] sm:$0xff]
    %v171 = vld [vmem:[#allocation7 + $0x10] sm:$0xff]
    %v172 = vld [vmem:[#allocation7 + $0x18] sm:$0xff]
    %v173 = vld [vmem:[#allocation7 + $0x20] sm:$0xff]
    %v174 = vld [vmem:[#allocation7 + $0x28] sm:$0xff]
    %v175 = vld [vmem:[#allocation7 + $0x30] sm:$0xff]
    %v176 = vld [vmem:[#allocation7 + $0x38] sm:$0xff]
    %v177 = vld [vmem:[#allocation7 + $0x40] sm:$0xff]
    %v178 = vld [vmem:[#allocation7 + $0x48] sm:$0xff]
    %v179 = vld [vmem:[#allocation7 + $0x50] sm:$0xff]
    %v180 = vld [vmem:[#allocation7 + $0x58] sm:$0xff]
    %v181 = vld [vmem:[#allocation7 + $0x60] sm:$0xff]
    %v182 = vld [vmem:[#allocation7 + $0x68] sm:$0xff]
    %v183 = vld [vmem:[#allocation7 + $0x70] sm:$0xff]
    %v184 = vld [vmem:[#allocation7 + $0x78] sm:$0xff]
    %185 = vmatprep.subr.mxu0 0.0
    %186 = vmatpush1.msra.mxu0 %v169
    %187 = vmatprep.subr.mxu0 0.0
    %188 = vmatpush1.msra.mxu0 %v170
    %189 = vmatprep.subr.mxu0 0.0
    %190 = vmatpush1.msra.mxu0 %v171
    %191 = vmatprep.subr.mxu0 0.0
    %192 = vmatpush1.msra.mxu0 %v172
    %193 = vmatprep.subr.mxu0 0.0
    %194 = vmatpush1.msra.mxu0 %v173
    %195 = vmatprep.subr.mxu0 0.0
    %196 = vmatpush1.msra.mxu0 %v174
    %197 = vmatprep.subr.mxu0 0.0
    %198 = vmatpush1.msra.mxu0 %v175
    %199 = vmatprep.subr.mxu0 0.0
    %200 = vmatpush1.msra.mxu0 %v176
    %201 = vmatprep.subr.mxu0 0.0
    %202 = vmatpush1.msra.mxu0 %v177
    %203 = vmatprep.subr.mxu0 0.0
    %204 = vmatpush1.msra.mxu0 %v178
    %205 = vmatprep.subr.mxu0 0.0
    %206 = vmatpush1.msra.mxu0 %v179
    %207 = vmatprep.subr.mxu0 0.0
    %208 = vmatpush1.msra.mxu0 %v180
    %209 = vmatprep.subr.mxu0 0.0
    %210 = vmatpush1.msra.mxu0 %v181
    %211 = vmatprep.subr.mxu0 0.0
    %212 = vmatpush1.msra.mxu0 %v182
    %213 = vmatprep.subr.mxu0 0.0
    %214 = vmatpush1.msra.mxu0 %v183
    %215 = vmatprep.subr.mxu0 0.0
    %216 = vmatpush1.msra.mxu0 %v184
    %217 = vmatprep.subr.mxu0 0.0
    %218 = vmatpush1.msra.mxu0 0.0
    %219 = vmatprep.subr.mxu0 0.0
    %220 = vmatpush1.msra.mxu0 0.0
    %221 = vmatprep.subr.mxu0 0.0
    %222 = vmatpush1.msra.mxu0 0.0
    %223 = vmatprep.subr.mxu0 0.0
    %224 = vmatpush1.msra.mxu0 0.0
    %225 = vmatprep.subr.mxu0 0.0
    %226 = vmatpush1.msra.mxu0 0.0
    %227 = vmatprep.subr.mxu0 0.0
    %228 = vmatpush1.msra.mxu0 0.0
    %229 = vmatprep.subr.mxu0 0.0
    %230 = vmatpush1.msra.mxu0 0.0
    %231 = vmatprep.subr.mxu0 0.0
    %232 = vmatpush1.msra.mxu0 0.0
    %233 = vmatprep.subr.mxu0 0.0
    %234 = vmatpush1.msra.mxu0 0.0
    %235 = vmatprep.subr.mxu0 0.0
    %236 = vmatpush1.msra.mxu0 0.0
    %237 = vmatprep.subr.mxu0 0.0
    %238 = vmatpush1.msra.mxu0 0.0
    %239 = vmatprep.subr.mxu0 0.0
    %240 = vmatpush1.msra.mxu0 0.0
    %241 = vmatprep.subr.mxu0 0.0
    %242 = vmatpush1.msra.mxu0 0.0
    %243 = vmatprep.subr.mxu0 0.0
    %244 = vmatpush1.msra.mxu0 0.0
    %245 = vmatprep.subr.mxu0 0.0
    %246 = vmatpush1.msra.mxu0 0.0
    %247 = vmatprep.subr.mxu0 0.0
    %248 = vmatpush1.msra.mxu0 0.0
    %249 = vmatprep.mubr.f32.mxu0 0.0
    %250 = vmatmul.mubr.f32.gmra.mrb[0].mxu0 %v168
    %v251 = vpop.f32.mrb[0].mxu0
    %v252 = vadd.f32 0.0, %v251
    %v253 = vpop.f32.mrb[0].mxu0
    %254 = vdwg.mxu0
    %v255 = vmul.f32 %v252, 0.5
    %v256 = vtanh.pop %v255
    %v257 = vadd.f32 %v256, 1.0
    %v258 = vmul.f32 %v257, 0.5
    %v259 = vld [vmem:[#allocation8] sm:$0xff]
    %v260 = vld [vmem:[#allocation8 + $0x8] sm:$0xff]
    %v261 = vld [vmem:[#allocation8 + $0x10] sm:$0xff]
    %v262 = vld [vmem:[#allocation8 + $0x18] sm:$0xff]
    %v263 = vld [vmem:[#allocation8 + $0x20] sm:$0xff]
    %v264 = vld [vmem:[#allocation8 + $0x28] sm:$0xff]
    %v265 = vld [vmem:[#allocation8 + $0x30] sm:$0xff]
    %v266 = vld [vmem:[#allocation8 + $0x38] sm:$0xff]
    %v267 = vld [vmem:[#allocation8 + $0x40] sm:$0xff]
    %v268 = vld [vmem:[#allocation8 + $0x48] sm:$0xff]
    %v269 = vld [vmem:[#allocation8 + $0x50] sm:$0xff]
    %v270 = vld [vmem:[#allocation8 + $0x58] sm:$0xff]
    %v271 = vld [vmem:[#allocation8 + $0x60] sm:$0xff]
    %v272 = vld [vmem:[#allocation8 + $0x68] sm:$0xff]
    %v273 = vld [vmem:[#allocation8 + $0x70] sm:$0xff]
    %v274 = vld [vmem:[#allocation8 + $0x78] sm:$0xff]
    %275 = vmatprep.subr.mxu0 0.0
    %276 = vmatpush1.msra.mxu0 %v259
    %277 = vmatprep.subr.mxu0 0.0
    %278 = vmatpush1.msra.mxu0 %v260
    %279 = vmatprep.subr.mxu0 0.0
    %280 = vmatpush1.msra.mxu0 %v261
    %281 = vmatprep.subr.mxu0 0.0
    %282 = vmatpush1.msra.mxu0 %v262
    %283 = vmatprep.subr.mxu0 0.0
    %284 = vmatpush1.msra.mxu0 %v263
    %285 = vmatprep.subr.mxu0 0.0
    %286 = vmatpush1.msra.mxu0 %v264
    %287 = vmatprep.subr.mxu0 0.0
    %288 = vmatpush1.msra.mxu0 %v265
    %289 = vmatprep.subr.mxu0 0.0
    %290 = vmatpush1.msra.mxu0 %v266
    %291 = vmatprep.subr.mxu0 0.0
    %292 = vmatpush1.msra.mxu0 %v267
    %293 = vmatprep.subr.mxu0 0.0
    %294 = vmatpush1.msra.mxu0 %v268
    %295 = vmatprep.subr.mxu0 0.0
    %296 = vmatpush1.msra.mxu0 %v269
    %297 = vmatprep.subr.mxu0 0.0
    %298 = vmatpush1.msra.mxu0 %v270
    %299 = vmatprep.subr.mxu0 0.0
    %300 = vmatpush1.msra.mxu0 %v271
    %301 = vmatprep.subr.mxu0 0.0
    %302 = vmatpush1.msra.mxu0 %v272
    %303 = vmatprep.subr.mxu0 0.0
    %304 = vmatpush1.msra.mxu0 %v273
    %305 = vmatprep.subr.mxu0 0.0
    %306 = vmatpush1.msra.mxu0 %v274
    %307 = vmatprep.subr.mxu0 0.0
    %308 = vmatpush1.msra.mxu0 0.0
    %309 = vmatprep.subr.mxu0 0.0
    %310 = vmatpush1.msra.mxu0 0.0
    %311 = vmatprep.subr.mxu0 0.0
    %312 = vmatpush1.msra.mxu0 0.0
    %313 = vmatprep.subr.mxu0 0.0
    %314 = vmatpush1.msra.mxu0 0.0
    %315 = vmatprep.subr.mxu0 0.0
    %316 = vmatpush1.msra.mxu0 0.0
    %317 = vmatprep.subr.mxu0 0.0
    %318 = vmatpush1.msra.mxu0 0.0
    %319 = vmatprep.subr.mxu0 0.0
    %320 = vmatpush1.msra.mxu0 0.0
    %321 = vmatprep.subr.mxu0 0.0
    %322 = vmatpush1.msra.mxu0 0.0
    %323 = vmatprep.subr.mxu0 0.0
    %324 = vmatpush1.msra.mxu0 0.0
    %325 = vmatprep.subr.mxu0 0.0
    %326 = vmatpush1.msra.mxu0 0.0
    %327 = vmatprep.subr.mxu0 0.0
    %328 = vmatpush1.msra.mxu0 0.0
    %329 = vmatprep.subr.mxu0 0.0
    %330 = vmatpush1.msra.mxu0 0.0
    %331 = vmatprep.subr.mxu0 0.0
    %332 = vmatpush1.msra.mxu0 0.0
    %333 = vmatprep.subr.mxu0 0.0
    %334 = vmatpush1.msra.mxu0 0.0
    %335 = vmatprep.subr.mxu0 0.0
    %336 = vmatpush1.msra.mxu0 0.0
    %337 = vmatprep.subr.mxu0 0.0
    %338 = vmatpush1.msra.mxu0 0.0
    %339 = vmatprep.mubr.f32.mxu0 0.0
    %340 = vmatmul.mubr.f32.gmra.mrb[0].mxu0 %v258
    %v341 = vpop.f32.mrb[0].mxu0
    %v342 = vadd.f32 0.0, %v341
    %v343 = vpop.f32.mrb[0].mxu0
    %344 = vdwg.mxu0
    %v345 = vmul.f32 %v342, 0.5
    %v346 = vtanh.pop %v345
    %v347 = vadd.f32 %v346, 1.0
    %v348 = vmul.f32 %v347, 0.5
    %v349 = vld [vmem:[#allocation10] sm:$0xff]
    %v350 = vld [vmem:[#allocation10 + $0x8] sm:$0xff]
    %v351 = vld [vmem:[#allocation10 + $0x10] sm:$0xff]
    %v352 = vld [vmem:[#allocation10 + $0x18] sm:$0xff]
    %v353 = vld [vmem:[#allocation10 + $0x20] sm:$0xff]
    %v354 = vld [vmem:[#allocation10 + $0x28] sm:$0xff]
    %v355 = vld [vmem:[#allocation10 + $0x30] sm:$0xff]
    %v356 = vld [vmem:[#allocation10 + $0x38] sm:$0xff]
    %v357 = vld [vmem:[#allocation10 + $0x40] sm:$0xff]
    %v358 = vld [vmem:[#allocation10 + $0x48] sm:$0xff]
    %v359 = vld [vmem:[#allocation10 + $0x50] sm:$0xff]
    %v360 = vld [vmem:[#allocation10 + $0x58] sm:$0xff]
    %v361 = vld [vmem:[#allocation10 + $0x60] sm:$0xff]
    %v362 = vld [vmem:[#allocation10 + $0x68] sm:$0xff]
    %v363 = vld [vmem:[#allocation10 + $0x70] sm:$0xff]
    %v364 = vld [vmem:[#allocation10 + $0x78] sm:$0xff]
    %365 = vmatprep.subr.mxu0 0.0
    %366 = vmatpush1.msra.mxu0 %v349
    %367 = vmatprep.subr.mxu0 0.0
    %368 = vmatpush1.msra.mxu0 %v350
    %369 = vmatprep.subr.mxu0 0.0
    %370 = vmatpush1.msra.mxu0 %v351
    %371 = vmatprep.subr.mxu0 0.0
    %372 = vmatpush1.msra.mxu0 %v352
    %373 = vmatprep.subr.mxu0 0.0
    %374 = vmatpush1.msra.mxu0 %v353
    %375 = vmatprep.subr.mxu0 0.0
    %376 = vmatpush1.msra.mxu0 %v354
    %377 = vmatprep.subr.mxu0 0.0
    %378 = vmatpush1.msra.mxu0 %v355
    %379 = vmatprep.subr.mxu0 0.0
    %380 = vmatpush1.msra.mxu0 %v356
    %381 = vmatprep.subr.mxu0 0.0
    %382 = vmatpush1.msra.mxu0 %v357
    %383 = vmatprep.subr.mxu0 0.0
    %384 = vmatpush1.msra.mxu0 %v358
    %385 = vmatprep.subr.mxu0 0.0
    %386 = vmatpush1.msra.mxu0 %v359
    %387 = vmatprep.subr.mxu0 0.0
    %388 = vmatpush1.msra.mxu0 %v360
    %389 = vmatprep.subr.mxu0 0.0
    %390 = vmatpush1.msra.mxu0 %v361
    %391 = vmatprep.subr.mxu0 0.0
    %392 = vmatpush1.msra.mxu0 %v362
    %393 = vmatprep.subr.mxu0 0.0
    %394 = vmatpush1.msra.mxu0 %v363
    %395 = vmatprep.subr.mxu0 0.0
    %396 = vmatpush1.msra.mxu0 %v364
    %397 = vmatprep.subr.mxu0 0.0
    %398 = vmatpush1.msra.mxu0 0.0
    %399 = vmatprep.subr.mxu0 0.0
    %400 = vmatpush1.msra.mxu0 0.0
    %401 = vmatprep.subr.mxu0 0.0
    %402 = vmatpush1.msra.mxu0 0.0
    %403 = vmatprep.subr.mxu0 0.0
    %404 = vmatpush1.msra.mxu0 0.0
    %405 = vmatprep.subr.mxu0 0.0
    %406 = vmatpush1.msra.mxu0 0.0
    %407 = vmatprep.subr.mxu0 0.0
    %408 = vmatpush1.msra.mxu0 0.0
    %409 = vmatprep.subr.mxu0 0.0
    %410 = vmatpush1.msra.mxu0 0.0
    %411 = vmatprep.subr.mxu0 0.0
    %412 = vmatpush1.msra.mxu0 0.0
    %413 = vmatprep.subr.mxu0 0.0
    %414 = vmatpush1.msra.mxu0 0.0
    %415 = vmatprep.subr.mxu0 0.0
    %416 = vmatpush1.msra.mxu0 0.0
    %417 = vmatprep.subr.mxu0 0.0
    %418 = vmatpush1.msra.mxu0 0.0
    %419 = vmatprep.subr.mxu0 0.0
    %420 = vmatpush1.msra.mxu0 0.0
    %421 = vmatprep.subr.mxu0 0.0
    %422 = vmatpush1.msra.mxu0 0.0
    %423 = vmatprep.subr.mxu0 0.0
    %424 = vmatpush1.msra.mxu0 0.0
    %425 = vmatprep.subr.mxu0 0.0
    %426 = vmatpush1.msra.mxu0 0.0
    %427 = vmatprep.subr.mxu0 0.0
    %428 = vmatpush1.msra.mxu0 0.0
    %429 = vmatprep.mubr.f32.mxu0 0.0
    %430 = vmatmul.mubr.f32.gmra.mrb[0].mxu0 %v348
    %v431 = vpop.f32.mrb[0].mxu0
    %v432 = vadd.f32 0.0, %v431
    %v433 = vpop.f32.mrb[0].mxu0
    %434 = vdwg.mxu0
    %v435 = vmul.f32 %v432, 0.5
    %v436 = vtanh.pop %v435
    %v437 = vadd.f32 %v436, 1.0
    %v438 = vmul.f32 %v437, 0.5
    %439 = vst [vmem:[#allocation11] sm:$0xff] %v438
    // Predicated region
    $region42: #{neural_network_forward.1} parent=1 // pred_check
      _
    $region43: #{neural_network_forward.1} parent=1 // pred_check_branch
      %441 = sbr.rel (0) target = $region45
    $region44: #{neural_network_forward.1} parent=1 // pred_region
      %s443 = ssub.s32 128, 128
      %444 = vsyncadd [#allocation4], %s443
      %s446 = sshll.u32 [#allocation11], 4
      %s447 = int_to_ptr.vmem [resolvable:$true] %s446
      %449 = dma.vmem_to_hbm [thread:$0]  %s447, 128, %s5, [#allocation4]
    $region45: #{neural_network_forward.1} parent=1 // pred_fallthru
      _
    // Predicated region
    $region46: #{neural_network_forward.1} parent=1 // pred_check
      _
    $region47: #{neural_network_forward.1} parent=1 // pred_check_branch
      %451 = sbr.rel (0) target = $region49
    $region48: #{neural_network_forward.1} parent=1 // pred_region
      %452 = dma.done [#allocation4], 128
    $region49: #{neural_network_forward.1} parent=1 // pred_fallthru
      _
    %453 = vsyncpa [#allocation3], 1
    %454 = vsyncpa [#allocation6], 1
    %455 = vsyncpa [#allocation9], 1
    %456 = vsyncpa [#allocation4], 1

</llo_original>
